<compile_context>
chip_gen: v6e
topology: v6e:2x2x1
jax: 0.10.0
libtpu: 0.0.40
codegen_flags: <defaults>
</compile_context>

<pallas_src>
import functools

import jax
import jax.numpy as jnp
from jax.experimental import pallas as pl
from jax.experimental.pallas import tpu as pltpu


def _attention_kernel(x_ref, lnw_ref, lnb_ref, wqkv_ref, bqkv_ref, wo_ref, bo_ref,
                      mask_ref, o_ref, *, heads):
    """One batch element per grid step.

    x_ref    : (1, S, D) f32 input block
    lnw/lnb  : (1, D)    f32 LayerNorm affine
    wqkv_ref : (D, 3D)   bf16 fused, pre-transposed QKV weight (Q third pre-scaled)
    bqkv_ref : (1, 3D)   f32 fused QKV bias (Q third pre-scaled)
    wo_ref   : (D, D)    bf16 pre-transposed out_proj weight
    bo_ref   : (1, D)    f32 out_proj bias
    mask_ref : (H*S, D)  bf16 0/1 block-packing mask, mask[h*S+j, d] = (d // dh == h)
    o_ref    : (1, S, D) output block
    """
    S = x_ref.shape[1]
    D = x_ref.shape[2]

    x = x_ref[0, :, :]                                                    # (S, D) f32

    # ---- LayerNorm (eps = 1e-5, elementwise affine), fp32 ----
    mean = jnp.mean(x, axis=-1, keepdims=True)
    xc = x - mean
    var = jnp.mean(xc * xc, axis=-1, keepdims=True)
    xn = xc * jax.lax.rsqrt(var + 1e-5) * lnw_ref[...] + lnb_ref[...]     # (S, D)

    # ---- fused QKV projection: one MXU pass, bf16 operands, f32 accumulate ----
    qkv = jnp.dot(xn.astype(jnp.bfloat16), wqkv_ref[...],
                  preferred_element_type=jnp.float32) + bqkv_ref[...]     # (S, 3D)
    # Static, lane-aligned slices (D is a multiple of 128 in the test config).
    q = qkv[:, 0 * D:1 * D].astype(jnp.bfloat16)   # already scaled by 1/sqrt(dh)
    k = qkv[:, 1 * D:2 * D].astype(jnp.bfloat16)
    v = qkv[:, 2 * D:3 * D].astype(jnp.bfloat16)

    # ---- block-diagonal head packing ----
    # k_pack[h*S+j, d] = k[j, d] for d inside head h's lane range, else 0 (ditto
    # v_pack), so a single contraction over D yields every head's scores at once
    # and a single PV matmul writes each head's output at its final lane offset.
    mask = mask_ref[...]                                                  # (HS, D) bf16
    k_pack = jnp.tile(k, (heads, 1)) * mask                               # (HS, D)
    v_pack = jnp.tile(v, (heads, 1)) * mask                               # (HS, D)

    # Packed scores: head h occupies lanes [h*S, (h+1)*S) -> lane-dense (S, HS).
    s = jax.lax.dot_general(q, k_pack, (((1,), (1,)), ((), ())),
                            preferred_element_type=jnp.float32)           # (S, HS)

    # Softmax with a per-query max over the packed row (shift-invariant per head
    # since the normalization below is strictly per head; see header note).
    m = jnp.max(s, axis=-1, keepdims=True)
    p = jnp.exp(s - m).astype(jnp.bfloat16)                               # (S, HS)

    # PV and per-head denominator: two lane-dense MXU matmuls.  `l` carries each
    # head's probability sum broadcast across that head's dh output lanes, so the
    # deferred normalization is a plain elementwise multiply (EUP reciprocal).
    o = jnp.dot(p, v_pack, preferred_element_type=jnp.float32)            # (S, D)
    l = jnp.dot(p, mask, preferred_element_type=jnp.float32)              # (S, D)
    # approx=False gives bit-closer parity with torch's fp32 softmax if needed.
    o = o * pl.reciprocal(l, approx=True)

    # ---- out_proj ----
    out = jnp.dot(o.astype(jnp.bfloat16), wo_ref[...],
                  preferred_element_type=jnp.float32) + bo_ref[...]
    o_ref[0, :, :] = out.astype(o_ref.dtype)


def _head_packing_mask(heads, seq_len, dim):
    """0/1 mask (H*S, D): mask[h*S + j, d] = 1 iff lane d belongs to head h."""
    dh = dim // heads
    row_head = jnp.arange(heads * seq_len, dtype=jnp.int32)[:, None] // seq_len
    col_head = jnp.arange(dim, dtype=jnp.int32)[None, :] // dh
    return (row_head == col_head).astype(jnp.bfloat16)


def attention_forward(x, kp, heads):
    """x: (B, S, D) float32. kp: dict from prepare_kernel_params. Returns (B, S, D)."""
    B, S, D = x.shape
    assert D % heads == 0, "head packing requires dim % heads == 0"
    three_d = 3 * D
    HS = heads * S
    mask = _head_packing_mask(heads, S, D)

    kernel = functools.partial(_attention_kernel, heads=heads)

    def full2d(r, c):
        return pl.BlockSpec((r, c), lambda b: (0, 0))

    # grid=(B,) keeps one step per batch row: with B=2 this maps exactly one step
    # onto each of v7x's two TensorCores ("parallel").  At larger B / production S,
    # block several rows per step or add a query-tile grid axis to amortize the
    # ~0.35 us per-step pipeline overhead (see flash-tiling TODO in the header).
    return pl.pallas_call(
        kernel,
        out_shape=jax.ShapeDtypeStruct((B, S, D), x.dtype),
        grid_spec=pltpu.PrefetchScalarGridSpec(
            num_scalar_prefetch=0,
            grid=(B,),
            in_specs=[
                pl.BlockSpec((1, S, D), lambda b: (b, 0, 0)),   # x
                full2d(1, D), full2d(1, D),                     # ln_w, ln_b
                full2d(D, three_d),                             # wqkv (bf16, fused)
                full2d(1, three_d),                             # bqkv (f32, fused)
                full2d(D, D),                                   # wo (bf16)
                full2d(1, D),                                   # bo
                full2d(HS, D),                                  # head-packing mask (bf16)
            ],
            out_specs=pl.BlockSpec((1, S, D), lambda b: (b, 0, 0)),
        ),
        compiler_params=pltpu.CompilerParams(
            dimension_semantics=("parallel",),
            # 32 MiB scoped VMEM fits v7x's 64 MiB physical with headroom for the
            # double-buffered blocks; raise toward 64-100 MiB on v5e/v6e (128 MiB
            # physical) only when production tile sizes need it.
            vmem_limit_bytes=32 * 1024 * 1024),
    )(x, kp["ln_w"], kp["ln_b"], kp["wqkv"], kp["bqkv"], kp["wo"], kp["bo"], mask)


# ----------------------------- host-side parameter prep -----------------------------

def make_params(dim, key):
    """Synthetic fp32 parameters with nn.LayerNorm + nn.MultiheadAttention shapes.
    Projection matrices stored PRE-TRANSPOSED ((in, out)) so kernels compute x @ W."""
    ks = jax.random.split(key, 8)
    scale = 1.0 / (dim ** 0.5)
    return {
        "ln_w": jax.random.normal(ks[4], (1, dim), jnp.float32) * 0.1 + 1.0,
        "ln_b": jax.random.normal(ks[5], (1, dim), jnp.float32) * 0.1,
        "wq": jax.random.normal(ks[0], (dim, dim), jnp.float32) * scale,
        "wk": jax.random.normal(ks[1], (dim, dim), jnp.float32) * scale,
        "wv": jax.random.normal(ks[2], (dim, dim), jnp.float32) * scale,
        "wo": jax.random.normal(ks[3], (dim, dim), jnp.float32) * scale,
        "bq": jax.random.normal(ks[6], (1, dim), jnp.float32) * 0.02,
        "bk": jnp.zeros((1, dim), jnp.float32),
        "bv": jax.random.normal(ks[7], (1, dim), jnp.float32) * 0.02,
        "bo": jnp.zeros((1, dim), jnp.float32),
    }


def prepare_kernel_params(p, heads):
    """Fuse Wq/Wk/Wv -> (D, 3D), fold 1/sqrt(dh) into the Q weights/bias, cast the
    matmul weights to bf16 (fp32 accumulation happens in the kernel)."""
    D = p["wq"].shape[0]
    dh = D // heads
    scale = 1.0 / (dh ** 0.5)
    return {
        "ln_w": p["ln_w"],
        "ln_b": p["ln_b"],
        "wqkv": jnp.concatenate([p["wq"] * scale, p["wk"], p["wv"]],
                                axis=1).astype(jnp.bfloat16),
        "bqkv": jnp.concatenate([p["bq"] * scale, p["bk"], p["bv"]], axis=1),
        "wo": p["wo"].astype(jnp.bfloat16),
        "bo": p["bo"],
    }


# ----------------------------------- references -------------------------------------

def _reference_fp32(x, p, heads):
    """Pure-JAX fp32 reference matching PyTorch LayerNorm + MultiheadAttention math."""
    B, S, D = x.shape
    dh = D // heads
    with jax.default_matmul_precision("highest"):
        mean = x.mean(-1, keepdims=True)
        var = ((x - mean) ** 2).mean(-1, keepdims=True)
        xn = (x - mean) / jnp.sqrt(var + 1e-5) * p["ln_w"] + p["ln_b"]
        q = xn @ p["wq"] + p["bq"]
        k = xn @ p["wk"] + p["bk"]
        v = xn @ p["wv"] + p["bv"]
        q = q.reshape(B, S, heads, dh).transpose(0, 2, 1, 3)
        k = k.reshape(B, S, heads, dh).transpose(0, 2, 1, 3)
        v = v.reshape(B, S, heads, dh).transpose(0, 2, 1, 3)
        s = jnp.einsum("bhqd,bhkd->bhqk", q, k) / jnp.sqrt(dh)
        pm = jax.nn.softmax(s, axis=-1)
        o = jnp.einsum("bhqk,bhkd->bhqd", pm, v)
        o = o.transpose(0, 2, 1, 3).reshape(B, S, D)
        return o @ p["wo"] + p["bo"]


def _reference_matched(x, kp, heads):
    """Same math with the same bf16 rounding points and the same packed-row max as
    the kernel (tight check); residual deltas are the approx reciprocal and MXU
    accumulation order."""
    B, S, D = x.shape
    dh = D // heads
    mean = x.mean(-1, keepdims=True)
    xc = x - mean
    var = (xc * xc).mean(-1, keepdims=True)
    xn = xc * jax.lax.rsqrt(var + 1e-5) * kp["ln_w"] + kp["ln_b"]
    qkv = jnp.einsum("bsd,df->bsf", xn.astype(jnp.bfloat16), kp["wqkv"],
                     preferred_element_type=jnp.float32) + kp["bqkv"]

    def split(a):
        return a.astype(jnp.bfloat16).reshape(B, S, heads, dh).transpose(0, 2, 1, 3)

    q = split(qkv[..., 0 * D:1 * D])
    k = split(qkv[..., 1 * D:2 * D])
    v = split(qkv[..., 2 * D:3 * D])
    s = jnp.einsum("bhqd,bhkd->bhqk", q, k, preferred_element_type=jnp.float32)
    m = s.max(axis=(1, 3), keepdims=True)          # per-(batch, query) max, as in kernel
    p = jnp.exp(s - m).astype(jnp.bfloat16)
    l = p.astype(jnp.float32).sum(-1, keepdims=True)
    o = jnp.einsum("bhqk,bhkd->bhqd", p, v, preferred_element_type=jnp.float32) / l
    attn = o.transpose(0, 2, 1, 3).reshape(B, S, D)
    return jnp.einsum("bsd,de->bse", attn.astype(jnp.bfloat16), kp["wo"],
                      preferred_element_type=jnp.float32) + kp["bo"]


if __name__ == "__main__":
    # dim=128, heads=8, dim_head=16: small, but keeps the last dim (and the packed
    # score width heads*S = 128) full 128-lane multiples so every matmul and every
    # input/output block is lane-dense.
    B, S, D, H = 2, 16, 128, 8
    key = jax.random.PRNGKey(0)
    kx, kparam = jax.random.split(key)
    x = jax.random.normal(kx, (B, S, D), jnp.float32)

    params = make_params(D, kparam)                 # torch-like fp32 params
    kparams = prepare_kernel_params(params, H)      # fused / scaled / bf16 weights

    out = jax.block_until_ready(attention_forward(x, kparams, H))
    assert out.shape == (B, S, D)

    ref_m = jax.block_until_ready(_reference_matched(x, kparams, H))
    ref_f = jax.block_until_ready(_reference_fp32(x, params, H))
    err_m = float(jnp.max(jnp.abs(out - ref_m)))
    err_f = float(jnp.max(jnp.abs(out - ref_f)))
    # Tight check vs. the precision-matched reference; loose sanity check vs. the
    # fp32 PyTorch-math reference (kernel runs the MXU path in bf16).
    assert err_m < 2e-2, f"matched-precision mismatch: {err_m}"
    assert err_f < 1.5e-1, f"fp32-reference mismatch: {err_f}"

    print("KERNEL_OK")
</pallas_src>

<mosaic_0001>
module attributes {stable_mosaic.version = 11 : i64} {
  func.func @_attention_kernel(%arg0: i32, %arg1: memref<1x16x128xf32, #tpu.memory_space<vmem>>, %arg2: memref<1x128xf32, #tpu.memory_space<vmem>>, %arg3: memref<1x128xf32, #tpu.memory_space<vmem>>, %arg4: memref<128x384xbf16, #tpu.memory_space<vmem>>, %arg5: memref<1x384xf32, #tpu.memory_space<vmem>>, %arg6: memref<128x128xbf16, #tpu.memory_space<vmem>>, %arg7: memref<1x128xf32, #tpu.memory_space<vmem>>, %arg8: memref<128x128xbf16, #tpu.memory_space<vmem>>, %arg9: memref<1x16x128xf32, #tpu.memory_space<vmem>>) attributes {dimension_semantics = [#tpu.dimension_semantics<parallel>], iteration_bounds = array<i64: 2>, scalar_prefetch = 0 : i64, scratch_operands = 0 : i64, tpu.core_type = #tpu.core_type<tc>, window_params = [{transform_indices = @transform_0, window_bounds = array<i64: 1, 16, 128>}, {pipeline_mode = #tpu.pipeline_mode<synchronous>, transform_indices = @transform_1, window_bounds = array<i64: 1, 128>}, {pipeline_mode = #tpu.pipeline_mode<synchronous>, transform_indices = @transform_2, window_bounds = array<i64: 1, 128>}, {pipeline_mode = #tpu.pipeline_mode<synchronous>, transform_indices = @transform_3, window_bounds = array<i64: 128, 384>}, {pipeline_mode = #tpu.pipeline_mode<synchronous>, transform_indices = @transform_4, window_bounds = array<i64: 1, 384>}, {pipeline_mode = #tpu.pipeline_mode<synchronous>, transform_indices = @transform_5, window_bounds = array<i64: 128, 128>}, {pipeline_mode = #tpu.pipeline_mode<synchronous>, transform_indices = @transform_6, window_bounds = array<i64: 1, 128>}, {pipeline_mode = #tpu.pipeline_mode<synchronous>, transform_indices = @transform_7, window_bounds = array<i64: 128, 128>}, {transform_indices = @transform_8, window_bounds = array<i64: 1, 16, 128>}]} {
    %c0 = arith.constant 0 : index
    %c0_0 = arith.constant 0 : index
    %c0_1 = arith.constant 0 : index
    %0 = vector.load %arg1[%c0, %c0_0, %c0_1] : memref<1x16x128xf32, #tpu.memory_space<vmem>>, vector<1x16x128xf32>
    %1 = vector.shape_cast %0 : vector<1x16x128xf32> to vector<16x128xf32>
    %cst = arith.constant dense<0.000000e+00> : vector<16xf32>
    %2 = vector.multi_reduction <add>, %1, %cst [1] : vector<16x128xf32> to vector<16xf32>
    %3 = vector.shape_cast %2 : vector<16xf32> to vector<16x1xf32>
    %cst_2 = arith.constant 1.280000e+02 : f32
    %4 = vector.broadcast %cst_2 : f32 to vector<16x1xf32>
    %5 = arith.divf %3, %4 : vector<16x1xf32>
    %6 = vector.broadcast %5 : vector<16x1xf32> to vector<16x128xf32>
    %7 = arith.subf %1, %6 : vector<16x128xf32>
    %8 = arith.mulf %7, %7 : vector<16x128xf32>
    %cst_3 = arith.constant dense<0.000000e+00> : vector<16xf32>
    %9 = vector.multi_reduction <add>, %8, %cst_3 [1] : vector<16x128xf32> to vector<16xf32>
    %10 = vector.shape_cast %9 : vector<16xf32> to vector<16x1xf32>
    %cst_4 = arith.constant 1.280000e+02 : f32
    %11 = vector.broadcast %cst_4 : f32 to vector<16x1xf32>
    %12 = arith.divf %10, %11 : vector<16x1xf32>
    %cst_5 = arith.constant 9.99999974E-6 : f32
    %13 = vector.broadcast %cst_5 : f32 to vector<16x1xf32>
    %14 = arith.addf %12, %13 : vector<16x1xf32>
    %15 = math.rsqrt %14 : vector<16x1xf32>
    %16 = vector.broadcast %15 : vector<16x1xf32> to vector<16x128xf32>
    %17 = arith.mulf %7, %16 : vector<16x128xf32>
    %c0_6 = arith.constant 0 : index
    %c0_7 = arith.constant 0 : index
    %18 = vector.load %arg2[%c0_6, %c0_7] : memref<1x128xf32, #tpu.memory_space<vmem>>, vector<1x128xf32>
    %19 = vector.broadcast %18 : vector<1x128xf32> to vector<16x128xf32>
    %20 = arith.mulf %17, %19 : vector<16x128xf32>
    %c0_8 = arith.constant 0 : index
    %c0_9 = arith.constant 0 : index
    %21 = vector.load %arg3[%c0_8, %c0_9] : memref<1x128xf32, #tpu.memory_space<vmem>>, vector<1x128xf32>
    %22 = vector.broadcast %21 : vector<1x128xf32> to vector<16x128xf32>
    %23 = arith.addf %20, %22 : vector<16x128xf32>
    %24 = arith.truncf %23 : vector<16x128xf32> to vector<16x128xbf16>
    %c0_10 = arith.constant 0 : index
    %c0_11 = arith.constant 0 : index
    %25 = vector.load %arg4[%c0_10, %c0_11] : memref<128x384xbf16, #tpu.memory_space<vmem>>, vector<128x384xbf16>
    %cst_12 = arith.constant dense<0.000000e+00> : vector<16x384xf32>
    %26 = tpu.matmul %24, %25, %cst_12 {dimension_numbers = #tpu.dot_dimension_numbers<[1], [0], [0], [1], [0, 0, 1, 1], [], []>} : vector<16x128xbf16>, vector<128x384xbf16>, vector<16x384xf32> -> vector<16x384xf32>
    %c0_13 = arith.constant 0 : index
    %c0_14 = arith.constant 0 : index
    %27 = vector.load %arg5[%c0_13, %c0_14] : memref<1x384xf32, #tpu.memory_space<vmem>>, vector<1x384xf32>
    %28 = vector.broadcast %27 : vector<1x384xf32> to vector<16x384xf32>
    %29 = arith.addf %26, %28 : vector<16x384xf32>
    %30 = vector.extract_strided_slice %29 {offsets = [0, 0], sizes = [16, 128], strides = [1, 1]} : vector<16x384xf32> to vector<16x128xf32>
    %31 = arith.truncf %30 : vector<16x128xf32> to vector<16x128xbf16>
    %32 = vector.extract_strided_slice %29 {offsets = [0, 128], sizes = [16, 128], strides = [1, 1]} : vector<16x384xf32> to vector<16x128xf32>
    %33 = arith.truncf %32 : vector<16x128xf32> to vector<16x128xbf16>
    %34 = vector.extract_strided_slice %29 {offsets = [0, 256], sizes = [16, 128], strides = [1, 1]} : vector<16x384xf32> to vector<16x128xf32>
    %35 = arith.truncf %34 : vector<16x128xf32> to vector<16x128xbf16>
    %c0_15 = arith.constant 0 : index
    %c0_16 = arith.constant 0 : index
    %36 = vector.load %arg8[%c0_15, %c0_16] : memref<128x128xbf16, #tpu.memory_space<vmem>>, vector<128x128xbf16>
    %37 = tpu.concatenate %33, %33, %33, %33, %33, %33, %33, %33 in 0 : vector<16x128xbf16>, vector<16x128xbf16>, vector<16x128xbf16>, vector<16x128xbf16>, vector<16x128xbf16>, vector<16x128xbf16>, vector<16x128xbf16>, vector<16x128xbf16> -> vector<128x128xbf16>
    %38 = arith.mulf %37, %36 : vector<128x128xbf16>
    %39 = tpu.concatenate %35, %35, %35, %35, %35, %35, %35, %35 in 0 : vector<16x128xbf16>, vector<16x128xbf16>, vector<16x128xbf16>, vector<16x128xbf16>, vector<16x128xbf16>, vector<16x128xbf16>, vector<16x128xbf16>, vector<16x128xbf16> -> vector<128x128xbf16>
    %40 = arith.mulf %39, %36 : vector<128x128xbf16>
    %cst_17 = arith.constant dense<0.000000e+00> : vector<16x128xf32>
    %41 = tpu.matmul %31, %38, %cst_17 {dimension_numbers = #tpu.dot_dimension_numbers<[1], [1], [0], [0], [0, 0, 1, 0], [], []>} : vector<16x128xbf16>, vector<128x128xbf16>, vector<16x128xf32> -> vector<16x128xf32>
    %cst_18 = arith.constant dense<0xFF800000> : vector<16xf32>
    %42 = vector.multi_reduction <maximumf>, %41, %cst_18 [1] : vector<16x128xf32> to vector<16xf32>
    %43 = vector.shape_cast %42 : vector<16xf32> to vector<16x1xf32>
    %44 = vector.broadcast %43 : vector<16x1xf32> to vector<16x128xf32>
    %45 = arith.subf %41, %44 : vector<16x128xf32>
    %46 = math.exp %45 : vector<16x128xf32>
    %47 = arith.truncf %46 : vector<16x128xf32> to vector<16x128xbf16>
    %cst_19 = arith.constant dense<0.000000e+00> : vector<16x128xf32>
    %48 = tpu.matmul %47, %40, %cst_19 {dimension_numbers = #tpu.dot_dimension_numbers<[1], [0], [0], [1], [0, 0, 1, 1], [], []>} : vector<16x128xbf16>, vector<128x128xbf16>, vector<16x128xf32> -> vector<16x128xf32>
    %cst_20 = arith.constant dense<0.000000e+00> : vector<16x128xf32>
    %49 = tpu.matmul %47, %36, %cst_20 {dimension_numbers = #tpu.dot_dimension_numbers<[1], [0], [0], [1], [0, 0, 1, 1], [], []>} : vector<16x128xbf16>, vector<128x128xbf16>, vector<16x128xf32> -> vector<16x128xf32>
    %50 = tpu.reciprocal %49 {approx = true} : vector<16x128xf32> -> vector<16x128xf32>
    %51 = arith.mulf %48, %50 : vector<16x128xf32>
    %52 = arith.truncf %51 : vector<16x128xf32> to vector<16x128xbf16>
    %c0_21 = arith.constant 0 : index
    %c0_22 = arith.constant 0 : index
    %53 = vector.load %arg6[%c0_21, %c0_22] : memref<128x128xbf16, #tpu.memory_space<vmem>>, vector<128x128xbf16>
    %cst_23 = arith.constant dense<0.000000e+00> : vector<16x128xf32>
    %54 = tpu.matmul %52, %53, %cst_23 {dimension_numbers = #tpu.dot_dimension_numbers<[1], [0], [0], [1], [0, 0, 1, 1], [], []>} : vector<16x128xbf16>, vector<128x128xbf16>, vector<16x128xf32> -> vector<16x128xf32>
    %c0_24 = arith.constant 0 : index
    %c0_25 = arith.constant 0 : index
    %55 = vector.load %arg7[%c0_24, %c0_25] : memref<1x128xf32, #tpu.memory_space<vmem>>, vector<1x128xf32>
    %56 = vector.broadcast %55 : vector<1x128xf32> to vector<16x128xf32>
    %57 = arith.addf %54, %56 : vector<16x128xf32>
    %c0_26 = arith.constant 0 : index
    %c0_27 = arith.constant 0 : index
    %c0_28 = arith.constant 0 : index
    %58 = vector.load %arg9[%c0_26, %c0_27, %c0_28] : memref<1x16x128xf32, #tpu.memory_space<vmem>>, vector<1x16x128xf32>
    %59 = vector.shape_cast %58 : vector<1x16x128xf32> to vector<16x128xf32>
    %60 = vector.shape_cast %57 : vector<16x128xf32> to vector<1x16x128xf32>
    tpu.vector_store %arg9[%c0_26, %c0_27, %c0_28], %60 {strides = array<i32>} : memref<1x16x128xf32, #tpu.memory_space<vmem>>, vector<1x16x128xf32>,
    return
  }
  func.func @transform_0(%arg0: i32) -> (i32, i32, i32) {
    %c0_i32 = arith.constant 0 : i32
    %c0_i32_0 = arith.constant 0 : i32
    %c0_i32_1 = arith.constant 0 : i32
    return %arg0, %c0_i32, %c0_i32_0 : i32, i32, i32
  }
  func.func @transform_1(%arg0: i32) -> (i32, i32) {
    %c0_i32 = arith.constant 0 : i32
    %c0_i32_0 = arith.constant 0 : i32
    %c0_i32_1 = arith.constant 0 : i32
    return %c0_i32, %c0_i32_0 : i32, i32
  }
  func.func @transform_2(%arg0: i32) -> (i32, i32) {
    %c0_i32 = arith.constant 0 : i32
    %c0_i32_0 = arith.constant 0 : i32
    %c0_i32_1 = arith.constant 0 : i32
    return %c0_i32, %c0_i32_0 : i32, i32
  }
  func.func @transform_3(%arg0: i32) -> (i32, i32) {
    %c0_i32 = arith.constant 0 : i32
    %c0_i32_0 = arith.constant 0 : i32
    %c0_i32_1 = arith.constant 0 : i32
    return %c0_i32, %c0_i32_0 : i32, i32
  }
  func.func @transform_4(%arg0: i32) -> (i32, i32) {
    %c0_i32 = arith.constant 0 : i32
    %c0_i32_0 = arith.constant 0 : i32
    %c0_i32_1 = arith.constant 0 : i32
    return %c0_i32, %c0_i32_0 : i32, i32
  }
  func.func @transform_5(%arg0: i32) -> (i32, i32) {
    %c0_i32 = arith.constant 0 : i32
    %c0_i32_0 = arith.constant 0 : i32
    %c0_i32_1 = arith.constant 0 : i32
    return %c0_i32, %c0_i32_0 : i32, i32
  }
  func.func @transform_6(%arg0: i32) -> (i32, i32) {
    %c0_i32 = arith.constant 0 : i32
    %c0_i32_0 = arith.constant 0 : i32
    %c0_i32_1 = arith.constant 0 : i32
    return %c0_i32, %c0_i32_0 : i32, i32
  }
  func.func @transform_7(%arg0: i32) -> (i32, i32) {
    %c0_i32 = arith.constant 0 : i32
    %c0_i32_0 = arith.constant 0 : i32
    %c0_i32_1 = arith.constant 0 : i32
    return %c0_i32, %c0_i32_0 : i32, i32
  }
  func.func @transform_8(%arg0: i32) -> (i32, i32, i32) {
    %c0_i32 = arith.constant 0 : i32
    %c0_i32_0 = arith.constant 0 : i32
    %c0_i32_1 = arith.constant 0 : i32
    return %arg0, %c0_i32, %c0_i32_0 : i32, i32, i32
  }
}

</mosaic_0001>

<llo_original>
// kernel: tpu_custom_call.1
$region0: #{tpu_custom_call.1}
  #allocation0 [shape = 'u32[]', space=smem, size = 0x4, offset = 0x4, fixed_abs, tag = 'smem constant byte address 0x4 - core index']
  #allocation1 [shape = 'u32[144,128]{1,0:T(1,128)}', space=vmem, size = 0x12000, scoped, tag = 'internal scratch']
  %s0 = inlined_call_operand.hbm [shape: f32[2,16,128], index: 0, kind: input, shape index: {}]
  %s1 = inlined_call_operand.vmem [shape: f32[1,128], index: 1, kind: input, shape index: {}]
  %s2 = inlined_call_operand.vmem [shape: f32[1,128], index: 2, kind: input, shape index: {}]
  %s3 = inlined_call_operand.hbm [shape: bf16[128,384], index: 3, kind: input, shape index: {}]
  %s4 = inlined_call_operand.vmem [shape: f32[1,384], index: 4, kind: input, shape index: {}]
  %s5 = inlined_call_operand.hbm [shape: bf16[128,128], index: 5, kind: input, shape index: {}]
  %s6 = inlined_call_operand.vmem [shape: f32[1,128], index: 6, kind: input, shape index: {}]
  %s7 = inlined_call_operand.hbm [shape: bf16[128,128], index: 7, kind: input, shape index: {}]
  %s8 = inlined_call_operand.hbm [shape: f32[2,16,128], index: 8, kind: output, shape index: {}]
  %s9 = sld [smem:[#allocation0]]
  $region81: #{tpu_custom_call.1} parent=0
    _
  %s11 = ssub.s32 1, %s9
  %s12 = scalar_select 0, %s11, %s9
  $region1: #{tpu_custom_call.1} parent=0
    #allocation2 [shape = 'u8[16384]{0}', space=vmem, size = 0x4000, scoped, tag = 'input window, operand 0']
    #allocation3 [shape = 's32[2]{0}', space=sflag, size = 0x8, scoped, tag = 'scoped memory for tpu_custom_call.1']
    #allocation4 [shape = 's32[2]{0}', space=sflag, size = 0x8, scoped, tag = 'scoped memory for tpu_custom_call.1']
    #allocation5 [shape = 'u8[98304]{0}', space=vmem, size = 0x18000, scoped, tag = 'input window, operand 3, single buffered']
    #allocation6 [shape = 's32[1]{0}', space=sflag, size = 0x4, scoped, tag = 'scoped memory for tpu_custom_call.1']
    #allocation7 [shape = 'u8[32768]{0}', space=vmem, size = 0x8000, scoped, tag = 'input window, operand 5, single buffered']
    #allocation8 [shape = 'u8[32768]{0}', space=vmem, size = 0x8000, scoped, tag = 'input window, operand 7, single buffered']
    #allocation9 [shape = 's32[1]{0}', space=sflag, size = 0x4, scoped, tag = 'scoped memory for tpu_custom_call.1']
    #allocation10 [shape = 'u8[16384]{0}', space=vmem, size = 0x4000, scoped, tag = 'output window, operand 0']
    %13 = vsyncpa [#allocation3], 0
    %s14 = scalar_lea.sflag [#allocation3], 1
    %15 = vsyncpa %s14, 0
    %16 = vsyncpa [#allocation6], 0
    %17 = vsyncpa [#allocation9], 0
    %18 = vsyncpa [#allocation4], 0
    %s19 = scalar_lea.sflag [#allocation4], 1
    %20 = vsyncpa %s19, 0
    loop: start=0, step=1, limit=4
    $region2: #{tpu_custom_call.1} parent=1 // loop_pre_header
      _
    $region3: #{tpu_custom_call.1} parent=1 // loop_header
      %s22 = sphi 0, %s26
      %p23 = scmp.ge.s32.totalorder %s22, 4
      %s32 = sphi 0, %s34
      %s35 = sphi 0, %s32
      %s36 = sphi 0, %s35
      %s52 = sphi 0, %s36
      %s56 = sphi 0, %s56
      %s58 = sphi 0, %s56
      %s59 = sphi 0, %s58
      %s73 = sphi 0, %s59
      %s77 = sphi 0, %s77
      %s79 = sphi 0, %s77
      %s80 = sphi 0, %s79
      %s94 = sphi 0, %s80
      %s98 = sphi 0, %s98
      %s100 = sphi 0, %s98
      %s101 = sphi 0, %s100
      %s115 = sphi 0, %s101
      %s119 = sphi 0, %s119
      %s121 = sphi 0, %s119
      %s122 = sphi 0, %s121
      %s136 = sphi 0, %s122
      %s140 = sphi 0, %s140
      %s142 = sphi 0, %s140
      %s143 = sphi 0, %s142
      %s157 = sphi 0, %s143
      %s161 = sphi 0, %s161
      %s163 = sphi 0, %s161
      %s164 = sphi 0, %s163
      %s178 = sphi 0, %s164
      %s182 = sphi 0, %s182
      %s184 = sphi 0, %s182
      %s185 = sphi 0, %s184
      %s199 = sphi 0, %s185
      %s205 = sphi 0, %s207
      %s208 = sphi 0, %s205
      %s209 = sphi 0, %s208
      %s225 = sphi 0, %s209
    $region4: #{tpu_custom_call.1} parent=1 // loop_header_branch
      %25 = sbr.rel (%p23) target = $region8
    $region5: #{tpu_custom_call.1} parent=1 // loop_body
      %s27 = ssub.s32 %s22, 1
      %s28 = ssub.s32 %s22, 2
      %s29 = sadd.s32 %s22, 1
      %s30 = ssub.s32 %s22, %s29
      %p31 = scmp.eq.s32.totalorder %s30, 0
      %s33 = sadd.s32 %s32, 1
      %s34 = scalar_select %p31, %s32, %s33
      %p37 = pneg %p31
      %p38 = scmp.eq.s32.totalorder %s22, 1
      %p39 = por %p37, %p38
      %p40 = scmp.ne.s32.totalorder %s32, %s35
      %p41 = scmp.eq.s32.totalorder %s22, 0
      %p42 = por %p40, %p41
      %p43 = scmp.ne.s32.totalorder %s32, %s35
      %p44 = scmp.eq.s32.totalorder %s27, 1
      %p45 = por %p43, %p44
      %p46 = scmp.ne.s32.totalorder %s35, %s36
      %p47 = scmp.eq.s32.totalorder %s27, 0
      %p48 = por %p46, %p47
      %p49 = scmp.ne.s32.totalorder %s35, %s36
      %p50 = scmp.eq.s32.totalorder %s28, 1
      %p51 = por %p49, %p50
      %p53 = scmp.ne.s32.totalorder %s36, %s52
      %p54 = scmp.eq.s32.totalorder %s28, 0
      %p55 = por %p53, %p54
      %s57 = sadd.s32 %s56, 1
      %p60 = scmp.eq.s32.totalorder %s22, 1
      %p61 = scmp.ne.s32.totalorder %s56, %s58
      %p62 = scmp.eq.s32.totalorder %s22, 0
      %p63 = por %p61, %p62
      %p64 = scmp.ne.s32.totalorder %s56, %s58
      %p65 = scmp.eq.s32.totalorder %s27, 1
      %p66 = por %p64, %p65
      %p67 = scmp.ne.s32.totalorder %s58, %s59
      %p68 = scmp.eq.s32.totalorder %s27, 0
      %p69 = por %p67, %p68
      %p70 = scmp.ne.s32.totalorder %s58, %s59
      %p71 = scmp.eq.s32.totalorder %s28, 1
      %p72 = por %p70, %p71
      %p74 = scmp.ne.s32.totalorder %s59, %s73
      %p75 = scmp.eq.s32.totalorder %s28, 0
      %p76 = por %p74, %p75
      %s78 = sadd.s32 %s77, 1
      %p81 = scmp.eq.s32.totalorder %s22, 1
      %p82 = scmp.ne.s32.totalorder %s77, %s79
      %p83 = scmp.eq.s32.totalorder %s22, 0
      %p84 = por %p82, %p83
      %p85 = scmp.ne.s32.totalorder %s77, %s79
      %p86 = scmp.eq.s32.totalorder %s27, 1
      %p87 = por %p85, %p86
      %p88 = scmp.ne.s32.totalorder %s79, %s80
      %p89 = scmp.eq.s32.totalorder %s27, 0
      %p90 = por %p88, %p89
      %p91 = scmp.ne.s32.totalorder %s79, %s80
      %p92 = scmp.eq.s32.totalorder %s28, 1
      %p93 = por %p91, %p92
      %p95 = scmp.ne.s32.totalorder %s80, %s94
      %p96 = scmp.eq.s32.totalorder %s28, 0
      %p97 = por %p95, %p96
      %s99 = sadd.s32 %s98, 1
      %p102 = scmp.eq.s32.totalorder %s22, 1
      %p103 = scmp.ne.s32.totalorder %s98, %s100
      %p104 = scmp.eq.s32.totalorder %s22, 0
      %p105 = por %p103, %p104
      %p106 = scmp.ne.s32.totalorder %s98, %s100
      %p107 = scmp.eq.s32.totalorder %s27, 1
      %p108 = por %p106, %p107
      %p109 = scmp.ne.s32.totalorder %s100, %s101
      %p110 = scmp.eq.s32.totalorder %s27, 0
      %p111 = por %p109, %p110
      %p112 = scmp.ne.s32.totalorder %s100, %s101
      %p113 = scmp.eq.s32.totalorder %s28, 1
      %p114 = por %p112, %p113
      %p116 = scmp.ne.s32.totalorder %s101, %s115
      %p117 = scmp.eq.s32.totalorder %s28, 0
      %p118 = por %p116, %p117
      %s120 = sadd.s32 %s119, 1
      %p123 = scmp.eq.s32.totalorder %s22, 1
      %p124 = scmp.ne.s32.totalorder %s119, %s121
      %p125 = scmp.eq.s32.totalorder %s22, 0
      %p126 = por %p124, %p125
      %p127 = scmp.ne.s32.totalorder %s119, %s121
      %p128 = scmp.eq.s32.totalorder %s27, 1
      %p129 = por %p127, %p128
      %p130 = scmp.ne.s32.totalorder %s121, %s122
      %p131 = scmp.eq.s32.totalorder %s27, 0
      %p132 = por %p130, %p131
      %p133 = scmp.ne.s32.totalorder %s121, %s122
      %p134 = scmp.eq.s32.totalorder %s28, 1
      %p135 = por %p133, %p134
      %p137 = scmp.ne.s32.totalorder %s122, %s136
      %p138 = scmp.eq.s32.totalorder %s28, 0
      %p139 = por %p137, %p138
      %s141 = sadd.s32 %s140, 1
      %p144 = scmp.eq.s32.totalorder %s22, 1
      %p145 = scmp.ne.s32.totalorder %s140, %s142
      %p146 = scmp.eq.s32.totalorder %s22, 0
      %p147 = por %p145, %p146
      %p148 = scmp.ne.s32.totalorder %s140, %s142
      %p149 = scmp.eq.s32.totalorder %s27, 1
      %p150 = por %p148, %p149
      %p151 = scmp.ne.s32.totalorder %s142, %s143
      %p152 = scmp.eq.s32.totalorder %s27, 0
      %p153 = por %p151, %p152
      %p154 = scmp.ne.s32.totalorder %s142, %s143
      %p155 = scmp.eq.s32.totalorder %s28, 1
      %p156 = por %p154, %p155
      %p158 = scmp.ne.s32.totalorder %s143, %s157
      %p159 = scmp.eq.s32.totalorder %s28, 0
      %p160 = por %p158, %p159
      %s162 = sadd.s32 %s161, 1
      %p165 = scmp.eq.s32.totalorder %s22, 1
      %p166 = scmp.ne.s32.totalorder %s161, %s163
      %p167 = scmp.eq.s32.totalorder %s22, 0
      %p168 = por %p166, %p167
      %p169 = scmp.ne.s32.totalorder %s161, %s163
      %p170 = scmp.eq.s32.totalorder %s27, 1
      %p171 = por %p169, %p170
      %p172 = scmp.ne.s32.totalorder %s163, %s164
      %p173 = scmp.eq.s32.totalorder %s27, 0
      %p174 = por %p172, %p173
      %p175 = scmp.ne.s32.totalorder %s163, %s164
      %p176 = scmp.eq.s32.totalorder %s28, 1
      %p177 = por %p175, %p176
      %p179 = scmp.ne.s32.totalorder %s164, %s178
      %p180 = scmp.eq.s32.totalorder %s28, 0
      %p181 = por %p179, %p180
      %s183 = sadd.s32 %s182, 1
      %p186 = scmp.eq.s32.totalorder %s22, 1
      %p187 = scmp.ne.s32.totalorder %s182, %s184
      %p188 = scmp.eq.s32.totalorder %s22, 0
      %p189 = por %p187, %p188
      %p190 = scmp.ne.s32.totalorder %s182, %s184
      %p191 = scmp.eq.s32.totalorder %s27, 1
      %p192 = por %p190, %p191
      %p193 = scmp.ne.s32.totalorder %s184, %s185
      %p194 = scmp.eq.s32.totalorder %s27, 0
      %p195 = por %p193, %p194
      %p196 = scmp.ne.s32.totalorder %s184, %s185
      %p197 = scmp.eq.s32.totalorder %s28, 1
      %p198 = por %p196, %p197
      %p200 = scmp.ne.s32.totalorder %s185, %s199
      %p201 = scmp.eq.s32.totalorder %s28, 0
      %p202 = por %p200, %p201
      %s203 = ssub.s32 %s22, %s29
      %p204 = scmp.eq.s32.totalorder %s203, 0
      %s206 = sadd.s32 %s205, 1
      %s207 = scalar_select %p204, %s205, %s206
      %p210 = pneg %p204
      %p211 = scmp.eq.s32.totalorder %s22, 1
      %p212 = por %p210, %p211
      %p213 = scmp.ne.s32.totalorder %s205, %s208
      %p214 = scmp.eq.s32.totalorder %s22, 0
      %p215 = por %p213, %p214
      %p216 = scmp.ne.s32.totalorder %s205, %s208
      %p217 = scmp.eq.s32.totalorder %s27, 1
      %p218 = por %p216, %p217
      %p219 = scmp.ne.s32.totalorder %s208, %s209
      %p220 = scmp.eq.s32.totalorder %s27, 0
      %p221 = por %p219, %p220
      %p222 = scmp.ne.s32.totalorder %s208, %s209
      %p223 = scmp.eq.s32.totalorder %s28, 1
      %p224 = por %p222, %p223
      %p226 = scmp.ne.s32.totalorder %s209, %s225
      %p227 = scmp.eq.s32.totalorder %s28, 0
      %p228 = por %p226, %p227
      %p229 = scmp.le.s32.totalorder 1, %s22
      %p230 = scmp.lt.s32.totalorder %s22, 3
      %p231 = pnand %p229, %p230
      %p232 = pneg %p231
      // Predicated region
      $region9: #{tpu_custom_call.1} parent=5 // pred_check
        _
      $region10: #{tpu_custom_call.1} parent=5 // pred_check_branch
        %234 = sbr.rel (%p231) target = $region12
      $region11: #{tpu_custom_call.1} parent=5 // pred_region
        %s235 = ssub.s32 %s22, 1
        // Predicated region
        $region13: #{tpu_custom_call.1} parent=11 // pred_check
          %p236 = pneg %p69
        $region14: #{tpu_custom_call.1} parent=11 // pred_check_branch
          %238 = sbr.rel (%p236) target = $region16
        $region15: #{tpu_custom_call.1} parent=11 // pred_region
          _
        $region16: #{tpu_custom_call.1} parent=11 // pred_fallthru
          _
        // Predicated region
        $region17: #{tpu_custom_call.1} parent=11 // pred_check
          %p239 = pneg %p90
        $region18: #{tpu_custom_call.1} parent=11 // pred_check_branch
          %241 = sbr.rel (%p239) target = $region20
        $region19: #{tpu_custom_call.1} parent=11 // pred_region
          _
        $region20: #{tpu_custom_call.1} parent=11 // pred_fallthru
          _
        // Predicated region
        $region21: #{tpu_custom_call.1} parent=11 // pred_check
          %p242 = pneg %p111
        $region22: #{tpu_custom_call.1} parent=11 // pred_check_branch
          %244 = sbr.rel (%p242) target = $region24
        $region23: #{tpu_custom_call.1} parent=11 // pred_region
          %s246 = ssub.s32 3072, 3072
          %247 = vsyncadd [#allocation6], %s246
          %s248 = sshll.u32 [#allocation5], 4
          %s249 = int_to_ptr.vmem [resolvable:$true] %s248
          %254 = dma.hbm_to_vmem [thread:$0]  %s3, 3072, %s249, [#allocation6], 192, 192, 12
        $region24: #{tpu_custom_call.1} parent=11 // pred_fallthru
          _
        // Predicated region
        $region25: #{tpu_custom_call.1} parent=11 // pred_check
          %p255 = pneg %p132
        $region26: #{tpu_custom_call.1} parent=11 // pred_check_branch
          %257 = sbr.rel (%p255) target = $region28
        $region27: #{tpu_custom_call.1} parent=11 // pred_region
          _
        $region28: #{tpu_custom_call.1} parent=11 // pred_fallthru
          _
        // Predicated region
        $region29: #{tpu_custom_call.1} parent=11 // pred_check
          %p258 = pneg %p153
        $region30: #{tpu_custom_call.1} parent=11 // pred_check_branch
          %260 = sbr.rel (%p258) target = $region32
        $region31: #{tpu_custom_call.1} parent=11 // pred_region
          %s262 = ssub.s32 1024, 1024
          %263 = vsyncadd [#allocation6], %s262
          %s264 = sshll.u32 [#allocation7], 4
          %s265 = int_to_ptr.vmem [resolvable:$true] %s264
          %270 = dma.hbm_to_vmem [thread:$0]  %s5, 1024, %s265, [#allocation6], 64, 64, 4
        $region32: #{tpu_custom_call.1} parent=11 // pred_fallthru
          _
        // Predicated region
        $region33: #{tpu_custom_call.1} parent=11 // pred_check
          %p271 = pneg %p174
        $region34: #{tpu_custom_call.1} parent=11 // pred_check_branch
          %273 = sbr.rel (%p271) target = $region36
        $region35: #{tpu_custom_call.1} parent=11 // pred_region
          _
        $region36: #{tpu_custom_call.1} parent=11 // pred_fallthru
          _
        // Predicated region
        $region37: #{tpu_custom_call.1} parent=11 // pred_check
          %p274 = pneg %p195
        $region38: #{tpu_custom_call.1} parent=11 // pred_check_branch
          %276 = sbr.rel (%p274) target = $region40
        $region39: #{tpu_custom_call.1} parent=11 // pred_region
          %s278 = ssub.s32 1024, 1024
          %279 = vsyncadd [#allocation9], %s278
          %s280 = sshll.u32 [#allocation8], 4
          %s281 = int_to_ptr.vmem [resolvable:$true] %s280
          %286 = dma.hbm_to_vmem [thread:$0]  %s7, 1024, %s281, [#allocation9], 64, 64, 4
        $region40: #{tpu_custom_call.1} parent=11 // pred_fallthru
          _
      $region12: #{tpu_custom_call.1} parent=5 // pred_fallthru
        _
      %p287 = scmp.lt.s32.totalorder %s22, 2
      // Predicated region
      $region41: #{tpu_custom_call.1} parent=5 // pred_check
        %p288 = pneg %p287
      $region42: #{tpu_custom_call.1} parent=5 // pred_check_branch
        %290 = sbr.rel (%p288) target = $region44
      $region43: #{tpu_custom_call.1} parent=5 // pred_region
        // Predicated region
        $region45: #{tpu_custom_call.1} parent=43 // pred_check
          %p291 = pneg %p42
        $region46: #{tpu_custom_call.1} parent=43 // pred_check_branch
          %293 = sbr.rel (%p291) target = $region48
        $region47: #{tpu_custom_call.1} parent=43 // pred_region
          %s294 = sand.u32 %s32, 1
          %s295 = scalar_lea.sflag [#allocation3], %s294
          %s296 = sand.u32 %s32, 1
          %s297 = smul.addr %s296, 16
          %s298 = scalar_lea.vmem [#allocation2], %s297
          %s300 = ssub.s32 256, 256
          %301 = vsyncadd %s295, %s300
          %s302 = smul.addr %s22, 2
          %s303 = smul.addr %s302, 128
          %s304 = scalar_lea.hbm %s0, %s303
          %s305 = sshll.u32 %s298, 4
          %s306 = int_to_ptr.vmem [resolvable:$true] %s305
          %311 = dma.hbm_to_vmem [thread:$0]  %s304, 256, %s306, %s295, 128, 128, 8
        $region48: #{tpu_custom_call.1} parent=43 // pred_fallthru
          _
      $region44: #{tpu_custom_call.1} parent=5 // pred_fallthru
        _
      %p312 = scmp.le.s32.totalorder 1, %s22
      %p313 = scmp.lt.s32.totalorder %s22, 3
      %p314 = pnand %p312, %p313
      %p315 = pneg %p314
      // Predicated region
      $region49: #{tpu_custom_call.1} parent=5 // pred_check
        _
      $region50: #{tpu_custom_call.1} parent=5 // pred_check_branch
        %317 = sbr.rel (%p314) target = $region52
      $region51: #{tpu_custom_call.1} parent=5 // pred_region
        %s318 = ssub.s32 %s22, 1
        %s319 = sand.u32 %s35, 1
        %s320 = scalar_lea.sflag [#allocation3], %s319
        %s321 = sand.u32 %s35, 1
        %s322 = smul.addr %s321, 16
        %s323 = scalar_lea.vmem [#allocation2], %s322
        // Predicated region
        $region53: #{tpu_custom_call.1} parent=51 // pred_check
          %p324 = pneg %p48
        $region54: #{tpu_custom_call.1} parent=51 // pred_check_branch
          %326 = sbr.rel (%p324) target = $region56
        $region55: #{tpu_custom_call.1} parent=51 // pred_region
          %327 = dma.done %s320, 256
        $region56: #{tpu_custom_call.1} parent=51 // pred_fallthru
          _
        // Predicated region
        $region57: #{tpu_custom_call.1} parent=51 // pred_check
          %p328 = pneg %p111
        $region58: #{tpu_custom_call.1} parent=51 // pred_check_branch
          %330 = sbr.rel (%p328) target = $region60
        $region59: #{tpu_custom_call.1} parent=51 // pred_region
          %331 = dma.done [#allocation6], 3072
        $region60: #{tpu_custom_call.1} parent=51 // pred_fallthru
          _
        // Predicated region
        $region61: #{tpu_custom_call.1} parent=51 // pred_check
          %p332 = pneg %p153
        $region62: #{tpu_custom_call.1} parent=51 // pred_check_branch
          %334 = sbr.rel (%p332) target = $region64
        $region63: #{tpu_custom_call.1} parent=51 // pred_region
          %335 = dma.done [#allocation6], 1024
        $region64: #{tpu_custom_call.1} parent=51 // pred_fallthru
          _
        // Predicated region
        $region65: #{tpu_custom_call.1} parent=51 // pred_check
          %p336 = pneg %p195
        $region66: #{tpu_custom_call.1} parent=51 // pred_check_branch
          %338 = sbr.rel (%p336) target = $region68
        $region67: #{tpu_custom_call.1} parent=51 // pred_region
          %339 = dma.done [#allocation9], 1024
        $region68: #{tpu_custom_call.1} parent=51 // pred_fallthru
          _
        %s340 = sand.u32 %s35, 1
        %s341 = scalar_lea.sflag [#allocation3], %s340
        %s342 = sand.u32 %s35, 1
        %s343 = smul.addr %s342, 16
        %s344 = scalar_lea.vmem [#allocation2], %s343
        %p345 = pneg %p48
        %p346 = pneg %p45
        %p347 = pneg %p69
        %p348 = pneg %p66
        %p349 = pneg %p90
        %p350 = pneg %p87
        %p351 = pneg %p111
        %p352 = pneg %p108
        %p353 = pneg %p132
        %p354 = pneg %p129
        %p355 = pneg %p153
        %p356 = pneg %p150
        %p357 = pneg %p174
        %p358 = pneg %p171
        %p359 = pneg %p195
        %p360 = pneg %p192
        %p361 = pneg %p221
        %p362 = pneg %p218
        %s363 = sand.u32 %s208, 1
        %s364 = scalar_lea.sflag [#allocation4], %s363
        %s365 = sand.u32 %s208, 1
        %s366 = smul.addr %s365, 16
        %s367 = scalar_lea.vmem [#allocation10], %s366
        %v369 = vld [vmem:[%s323] sm:$0xff]
        %v370 = vld [vmem:[%s323 + $0x8] sm:$0xff]
        %371 = vadd.xlane.f32.xlu0 %v369
        %v372 = vpop.xlane.xlu0 %371
        %373 = vadd.xlane.f32.xlu0 %v370
        %v374 = vpop.xlane.xlu0 %373
        %v375 = vrcp.pop 128.0
        %v376 = vmul.f32 %v372, %v375
        %v377 = vmul.f32 %v374, %v375
        %v378 = vsub.f32 %v369, %v376
        %v379 = vsub.f32 %v370, %v377
        %v380 = vmul.f32 %v378, %v378
        %v381 = vmul.f32 %v379, %v379
        %382 = vadd.xlane.f32.xlu0 %v380
        %v383 = vpop.xlane.xlu0 %382
        %384 = vadd.xlane.f32.xlu0 %v381
        %v385 = vpop.xlane.xlu0 %384
        %v386 = vmul.f32 %v383, %v375
        %v387 = vmul.f32 %v385, %v375
        %v388 = vadd.f32 %v386, 1e-05
        %v389 = vadd.f32 %v387, 1e-05
        %v390 = vrsqrt.pop %v388
        %v391 = vrsqrt.pop %v389
        %v392 = vmul.f32 %v378, %v390
        %v393 = vmul.f32 %v379, %v391
        %v394 = vld [vmem:[%s1] sm:$0x1]
        %v396 = vlaneseq
        %v397 = vshrl.u32 %v396, 7
        %v398 = vsub.s32 0, %v397
        %v399 = vrot.slane %v394, %v398
        %v401 = vmul.f32 %v392, %v399
        %v402 = vmul.f32 %v393, %v399
        %v403 = vld [vmem:[%s2] sm:$0x1]
        %v405 = vlaneseq
        %v406 = vshrl.u32 %v405, 7
        %v407 = vsub.s32 0, %v406
        %v408 = vrot.slane %v403, %v407
        %v410 = vadd.f32 %v401, %v408
        %v411 = vadd.f32 %v402, %v408
        %v412 = vpack.c.bf16 %v411, %v410
        %v413 = vld [vmem:[#allocation5] sm:$0xff]
        %v414 = vld [vmem:[#allocation5 + $0x8] sm:$0xf]
        %v415 = vld [vmem:[#allocation5 + $0xc] sm:$0xff]
        %v416 = vld [vmem:[#allocation5 + $0x14] sm:$0xf]
        %v417 = vld [vmem:[#allocation5 + $0x18] sm:$0xff]
        %v418 = vld [vmem:[#allocation5 + $0x20] sm:$0xf]
        %v419 = vld [vmem:[#allocation5 + $0x24] sm:$0xff]
        %v420 = vld [vmem:[#allocation5 + $0x2c] sm:$0xf]
        %v421 = vld [vmem:[#allocation5 + $0x30] sm:$0xff]
        %v422 = vld [vmem:[#allocation5 + $0x38] sm:$0xf]
        %v423 = vld [vmem:[#allocation5 + $0x3c] sm:$0xff]
        %v424 = vld [vmem:[#allocation5 + $0x44] sm:$0xf]
        %v425 = vld [vmem:[#allocation5 + $0x48] sm:$0xff]
        %v426 = vld [vmem:[#allocation5 + $0x50] sm:$0xf]
        %v427 = vld [vmem:[#allocation5 + $0x54] sm:$0xff]
        %v428 = vld [vmem:[#allocation5 + $0x5c] sm:$0xf]
        %v429 = vld [vmem:[#allocation5 + $0x60] sm:$0xff]
        %v430 = vld [vmem:[#allocation5 + $0x68] sm:$0xf]
        %v431 = vld [vmem:[#allocation5 + $0x6c] sm:$0xff]
        %v432 = vld [vmem:[#allocation5 + $0x74] sm:$0xf]
        %v433 = vld [vmem:[#allocation5 + $0x78] sm:$0xff]
        %v434 = vld [vmem:[#allocation5 + $0x80] sm:$0xf]
        %v435 = vld [vmem:[#allocation5 + $0x84] sm:$0xff]
        %v436 = vld [vmem:[#allocation5 + $0x8c] sm:$0xf]
        %v437 = vld [vmem:[#allocation5 + $0x90] sm:$0xff]
        %v438 = vld [vmem:[#allocation5 + $0x98] sm:$0xf]
        %v439 = vld [vmem:[#allocation5 + $0x9c] sm:$0xff]
        %v440 = vld [vmem:[#allocation5 + $0xa4] sm:$0xf]
        %v441 = vld [vmem:[#allocation5 + $0xa8] sm:$0xff]
        %v442 = vld [vmem:[#allocation5 + $0xb0] sm:$0xf]
        %v443 = vld [vmem:[#allocation5 + $0xb4] sm:$0xff]
        %v444 = vld [vmem:[#allocation5 + $0xbc] sm:$0xf]
        %v445 = vld [vmem:[%s4] sm:$0x7]
        %v447 = vlaneseq
        %v448 = vshrl.u32 %v447, 7
        %v449 = vsub.s32 0, %v448
        %v450 = vrot.slane %v445, %v449
        %v451 = vlaneseq
        %v452 = vshrl.u32 %v451, 7
        %v453 = vsub.s32 1, %v452
        %v454 = vrot.slane %v445, %v453
        %v455 = vlaneseq
        %v456 = vshrl.u32 %v455, 7
        %v457 = vsub.s32 2, %v456
        %v458 = vrot.slane %v445, %v457
        %v494 = vunpack.c.l.b16 %v413
        %v495 = vunpack.c.h.b16 %v413
        %v496 = vunpack.c.l.b16 %v414
        %v497 = vunpack.c.l.b16 %v415
        %v498 = vunpack.c.h.b16 %v415
        %v499 = vunpack.c.l.b16 %v416
        %v500 = vunpack.c.l.b16 %v417
        %v501 = vunpack.c.h.b16 %v417
        %v502 = vunpack.c.l.b16 %v418
        %v503 = vunpack.c.l.b16 %v419
        %v504 = vunpack.c.h.b16 %v419
        %v505 = vunpack.c.l.b16 %v420
        %v506 = vunpack.c.l.b16 %v421
        %v507 = vunpack.c.h.b16 %v421
        %v508 = vunpack.c.l.b16 %v422
        %v509 = vunpack.c.l.b16 %v423
        %v510 = vunpack.c.h.b16 %v423
        %v511 = vunpack.c.l.b16 %v424
        %v512 = vunpack.c.l.b16 %v425
        %v513 = vunpack.c.h.b16 %v425
        %v514 = vunpack.c.l.b16 %v426
        %v515 = vunpack.c.l.b16 %v427
        %v516 = vunpack.c.h.b16 %v427
        %v517 = vunpack.c.l.b16 %v428
        %v518 = vunpack.c.l.b16 %v429
        %v519 = vunpack.c.h.b16 %v429
        %v520 = vunpack.c.l.b16 %v430
        %v521 = vunpack.c.l.b16 %v431
        %v522 = vunpack.c.h.b16 %v431
        %v523 = vunpack.c.l.b16 %v432
        %v524 = vunpack.c.l.b16 %v433
        %v525 = vunpack.c.h.b16 %v433
        %v526 = vunpack.c.l.b16 %v434
        %v527 = vunpack.c.l.b16 %v435
        %v528 = vunpack.c.h.b16 %v435
        %v529 = vunpack.c.l.b16 %v436
        %v530 = vunpack.c.l.b16 %v437
        %v531 = vunpack.c.h.b16 %v437
        %v532 = vunpack.c.l.b16 %v438
        %v533 = vunpack.c.l.b16 %v439
        %v534 = vunpack.c.h.b16 %v439
        %v535 = vunpack.c.l.b16 %v440
        %v536 = vunpack.c.l.b16 %v441
        %v537 = vunpack.c.h.b16 %v441
        %v538 = vunpack.c.l.b16 %v442
        %v539 = vunpack.c.l.b16 %v443
        %v540 = vunpack.c.h.b16 %v443
        %v541 = vunpack.c.l.b16 %v444
        %v542 = vpack.c.b16 %v497, %v494
        %v543 = vpack.c.b16 %v498, %v495
        %v544 = vpack.c.b16 %v499, %v496
        %v545 = vpack.c.b16 %v503, %v500
        %v546 = vpack.c.b16 %v504, %v501
        %v547 = vpack.c.b16 %v505, %v502
        %v548 = vpack.c.b16 %v509, %v506
        %v549 = vpack.c.b16 %v510, %v507
        %v550 = vpack.c.b16 %v511, %v508
        %v551 = vpack.c.b16 %v515, %v512
        %v552 = vpack.c.b16 %v516, %v513
        %v553 = vpack.c.b16 %v517, %v514
        %v554 = vpack.c.b16 %v521, %v518
        %v555 = vpack.c.b16 %v522, %v519
        %v556 = vpack.c.b16 %v523, %v520
        %v557 = vpack.c.b16 %v527, %v524
        %v558 = vpack.c.b16 %v528, %v525
        %v559 = vpack.c.b16 %v529, %v526
        %v560 = vpack.c.b16 %v533, %v530
        %v561 = vpack.c.b16 %v534, %v531
        %v562 = vpack.c.b16 %v535, %v532
        %v563 = vpack.c.b16 %v539, %v536
        %v564 = vpack.c.b16 %v540, %v537
        %v565 = vpack.c.b16 %v541, %v538
        %590 = vmatprep.subr.bf16.mxu0 %v564
        %591 = vmatpush1.bf16.msra.mxu0 %v563
        %592 = vmatprep.subr.bf16.mxu0 %v561
        %593 = vmatpush1.bf16.msra.mxu0 %v560
        %594 = vmatprep.subr.bf16.mxu0 %v558
        %595 = vmatpush1.bf16.msra.mxu0 %v557
        %596 = vmatprep.subr.bf16.mxu0 %v555
        %597 = vmatpush1.bf16.msra.mxu0 %v554
        %598 = vmatprep.subr.bf16.mxu0 %v552
        %599 = vmatpush1.bf16.msra.mxu0 %v551
        %600 = vmatprep.subr.bf16.mxu0 %v549
        %601 = vmatpush1.bf16.msra.mxu0 %v548
        %602 = vmatprep.subr.bf16.mxu0 %v546
        %603 = vmatpush1.bf16.msra.mxu0 %v545
        %604 = vmatprep.subr.bf16.mxu0 %v543
        %605 = vmatpush1.bf16.msra.mxu0 %v542
        %606 = vmatprep.subr.bf16.mxu0 0
        %607 = vmatpush2.bf16.msra.mxu0 0
        %608 = vmatprep.subr.bf16.mxu0 0
        %609 = vmatpush2.bf16.msra.mxu0 0
        %610 = vmatprep.subr.bf16.mxu0 0
        %611 = vmatpush2.bf16.msra.mxu0 0
        %612 = vmatprep.subr.bf16.mxu0 0
        %613 = vmatpush2.bf16.msra.mxu0 0
        %614 = vmatprep.subr.bf16.mxu0 0
        %615 = vmatpush2.bf16.msra.mxu0 0
        %616 = vmatprep.subr.bf16.mxu0 0
        %617 = vmatpush2.bf16.msra.mxu0 0
        %618 = vmatprep.subr.bf16.mxu0 0
        %619 = vmatpush2.bf16.msra.mxu0 0
        %620 = vmatprep.subr.bf16.mxu0 0
        %621 = vmatpush2.bf16.msra.mxu0 0
        %622 = vmatprep.mubr.bf16.mxu0 0
        %623 = vmatmul.mubr.bf16.gmra.mxu0 %v412
        %v624 = vpop.f32.mrf.mxu0
        %v625 = vadd.f32 %v450, %v624
        %v626 = vpop.f32.mrf.mxu0
        %v627 = vadd.f32 %v454, %v626
        %v628 = vpop.f32.mrf.mxu0
        %v629 = vadd.f32 %v450, %v628
        %v630 = vpop.f32.mrf.mxu0
        %v631 = vadd.f32 %v454, %v630
        %632 = vdwg.mxu0
        %633 = vmatprep.subr.bf16.mxu0 0
        %634 = vmatpush1.bf16.msra.mxu0 %v565
        %635 = vmatprep.subr.bf16.mxu0 0
        %636 = vmatpush1.bf16.msra.mxu0 %v562
        %637 = vmatprep.subr.bf16.mxu0 0
        %638 = vmatpush1.bf16.msra.mxu0 %v559
        %639 = vmatprep.subr.bf16.mxu0 0
        %640 = vmatpush1.bf16.msra.mxu0 %v556
        %641 = vmatprep.subr.bf16.mxu0 0
        %642 = vmatpush1.bf16.msra.mxu0 %v553
        %643 = vmatprep.subr.bf16.mxu0 0
        %644 = vmatpush1.bf16.msra.mxu0 %v550
        %645 = vmatprep.subr.bf16.mxu0 0
        %646 = vmatpush1.bf16.msra.mxu0 %v547
        %647 = vmatprep.subr.bf16.mxu0 0
        %648 = vmatpush1.bf16.msra.mxu0 %v544
        %649 = vmatprep.subr.bf16.mxu0 0
        %650 = vmatpush2.bf16.msra.mxu0 0
        %651 = vmatprep.subr.bf16.mxu0 0
        %652 = vmatpush2.bf16.msra.mxu0 0
        %653 = vmatprep.subr.bf16.mxu0 0
        %654 = vmatpush2.bf16.msra.mxu0 0
        %655 = vmatprep.subr.bf16.mxu0 0
        %656 = vmatpush2.bf16.msra.mxu0 0
        %657 = vmatprep.subr.bf16.mxu0 0
        %658 = vmatpush2.bf16.msra.mxu0 0
        %659 = vmatprep.subr.bf16.mxu0 0
        %660 = vmatpush2.bf16.msra.mxu0 0
        %661 = vmatprep.subr.bf16.mxu0 0
        %662 = vmatpush2.bf16.msra.mxu0 0
        %663 = vmatprep.subr.bf16.mxu0 0
        %664 = vmatpush2.bf16.msra.mxu0 0
        %665 = vmatprep.mubr.bf16.mxu0 0
        %666 = vmatmul.mubr.bf16.gmra.mxu0 %v412
        %v667 = vpop.f32.mrf.mxu0
        %v668 = vadd.f32 %v458, %v667
        %v669 = vpop.f32.mrf.mxu0
        %v670 = vpop.f32.mrf.mxu0
        %v671 = vadd.f32 %v458, %v670
        %v672 = vpop.f32.mrf.mxu0
        %673 = vdwg.mxu0
        %v674 = vpack.c.bf16 %v629, %v625
        %v675 = vpack.c.bf16 %v631, %v627
        %v676 = vpack.c.bf16 %v671, %v668
        %v677 = vld [vmem:[#allocation8] sm:$0xf]
        %v678 = vld [vmem:[#allocation8 + $0x4] sm:$0xf]
        %v679 = vld [vmem:[#allocation8 + $0x8] sm:$0xf]
        %v680 = vld [vmem:[#allocation8 + $0xc] sm:$0xf]
        %v681 = vld [vmem:[#allocation8 + $0x10] sm:$0xf]
        %v682 = vld [vmem:[#allocation8 + $0x14] sm:$0xf]
        %v683 = vld [vmem:[#allocation8 + $0x18] sm:$0xf]
        %v684 = vld [vmem:[#allocation8 + $0x1c] sm:$0xf]
        %v685 = vld [vmem:[#allocation8 + $0x20] sm:$0xf]
        %v686 = vld [vmem:[#allocation8 + $0x24] sm:$0xf]
        %v687 = vld [vmem:[#allocation8 + $0x28] sm:$0xf]
        %v688 = vld [vmem:[#allocation8 + $0x2c] sm:$0xf]
        %v689 = vld [vmem:[#allocation8 + $0x30] sm:$0xf]
        %v690 = vld [vmem:[#allocation8 + $0x34] sm:$0xf]
        %v691 = vld [vmem:[#allocation8 + $0x38] sm:$0xf]
        %v692 = vld [vmem:[#allocation8 + $0x3c] sm:$0xf]
        %v709 = vunpack.c.l.b16 %v677
        %v710 = vunpack.c.l.b16 %v678
        %v711 = vunpack.c.l.b16 %v679
        %v712 = vunpack.c.l.b16 %v680
        %v713 = vunpack.c.l.b16 %v681
        %v714 = vunpack.c.l.b16 %v682
        %v715 = vunpack.c.l.b16 %v683
        %v716 = vunpack.c.l.b16 %v684
        %v717 = vunpack.c.l.b16 %v685
        %v718 = vunpack.c.l.b16 %v686
        %v719 = vunpack.c.l.b16 %v687
        %v720 = vunpack.c.l.b16 %v688
        %v721 = vunpack.c.l.b16 %v689
        %v722 = vunpack.c.l.b16 %v690
        %v723 = vunpack.c.l.b16 %v691
        %v724 = vunpack.c.l.b16 %v692
        %v725 = vpack.c.b16 %v710, %v709
        %v726 = vpack.c.b16 %v712, %v711
        %v727 = vpack.c.b16 %v714, %v713
        %v728 = vpack.c.b16 %v716, %v715
        %v729 = vpack.c.b16 %v718, %v717
        %v730 = vpack.c.b16 %v720, %v719
        %v731 = vpack.c.b16 %v722, %v721
        %v732 = vpack.c.b16 %v724, %v723
        %v741 = vmul.bf16 %v675, %v725
        %v742 = vmul.bf16 %v675, %v726
        %v743 = vmul.bf16 %v675, %v727
        %v744 = vmul.bf16 %v675, %v728
        %v745 = vmul.bf16 %v675, %v729
        %v746 = vmul.bf16 %v675, %v730
        %v747 = vmul.bf16 %v675, %v731
        %v748 = vmul.bf16 %v675, %v732
        %v749 = vmul.bf16 %v676, %v725
        %v750 = vmul.bf16 %v676, %v726
        %v751 = vmul.bf16 %v676, %v727
        %v752 = vmul.bf16 %v676, %v728
        %v753 = vmul.bf16 %v676, %v729
        %v754 = vmul.bf16 %v676, %v730
        %v755 = vmul.bf16 %v676, %v731
        %v756 = vmul.bf16 %v676, %v732
        %757 = vmatprep.subr.bf16.mxu0 0
        %758 = vmatpush1.bf16.xpose.msra.mxu0 %v748
        %759 = vmatprep.subr.bf16.mxu0 0
        %760 = vmatpush1.bf16.xpose.msra.mxu0 %v747
        %761 = vmatprep.subr.bf16.mxu0 0
        %762 = vmatpush1.bf16.xpose.msra.mxu0 %v746
        %763 = vmatprep.subr.bf16.mxu0 0
        %764 = vmatpush1.bf16.xpose.msra.mxu0 %v745
        %765 = vmatprep.subr.bf16.mxu0 0
        %766 = vmatpush1.bf16.xpose.msra.mxu0 %v744
        %767 = vmatprep.subr.bf16.mxu0 0
        %768 = vmatpush1.bf16.xpose.msra.mxu0 %v743
        %769 = vmatprep.subr.bf16.mxu0 0
        %770 = vmatpush1.bf16.xpose.msra.mxu0 %v742
        %771 = vmatprep.subr.bf16.mxu0 0
        %772 = vmatpush1.bf16.xpose.msra.mxu0 %v741
        %773 = vmatprep.subr.bf16.mxu0 0
        %774 = vmatpush2.bf16.xpose.msra.mxu0 0
        %775 = vmatprep.subr.bf16.mxu0 0
        %776 = vmatpush2.bf16.xpose.msra.mxu0 0
        %777 = vmatprep.subr.bf16.mxu0 0
        %778 = vmatpush2.bf16.xpose.msra.mxu0 0
        %779 = vmatprep.subr.bf16.mxu0 0
        %780 = vmatpush2.bf16.xpose.msra.mxu0 0
        %781 = vmatprep.subr.bf16.mxu0 0
        %782 = vmatpush2.bf16.xpose.msra.mxu0 0
        %783 = vmatprep.subr.bf16.mxu0 0
        %784 = vmatpush2.bf16.xpose.msra.mxu0 0
        %785 = vmatprep.subr.bf16.mxu0 0
        %786 = vmatpush2.bf16.xpose.msra.mxu0 0
        %787 = vmatprep.subr.bf16.mxu0 0
        %788 = vmatpush2.bf16.xpose.msra.mxu0 0
        %789 = vmatprep.mubr.bf16.mxu0 0
        %790 = vmatmul.mubr.bf16.gmra.mxu0 %v674
        %v791 = vpop.f32.mrf.mxu0
        %v792 = vadd.f32 0.0, %v791
        %v793 = vpop.f32.mrf.mxu0
        %v794 = vpop.f32.mrf.mxu0
        %v795 = vadd.f32 0.0, %v794
        %v796 = vpop.f32.mrf.mxu0
        %797 = vdwg.mxu0
        %798 = vmax.xlane.f32.xlu0 %v792
        %v799 = vpop.xlane.xlu0 %798
        %800 = vmax.xlane.f32.xlu0 %v795
        %v801 = vpop.xlane.xlu0 %800
        %v802 = vsub.f32 %v792, %v799
        %v803 = vsub.f32 %v795, %v801
        %v804 = vmul.f32 %v802, 1.442695
        %v805 = vpow.pop %v804
        %v806 = vmul.f32 %v803, 1.442695
        %v807 = vpow.pop %v806
        %v808 = vpack.c.bf16 %v807, %v805
        %809 = vmatprep.subr.bf16.mxu0 0
        %810 = vmatpush1.bf16.msra.mxu0 %v756
        %811 = vmatprep.subr.bf16.mxu0 0
        %812 = vmatpush1.bf16.msra.mxu0 %v755
        %813 = vmatprep.subr.bf16.mxu0 0
        %814 = vmatpush1.bf16.msra.mxu0 %v754
        %815 = vmatprep.subr.bf16.mxu0 0
        %816 = vmatpush1.bf16.msra.mxu0 %v753
        %817 = vmatprep.subr.bf16.mxu0 0
        %818 = vmatpush1.bf16.msra.mxu0 %v752
        %819 = vmatprep.subr.bf16.mxu0 0
        %820 = vmatpush1.bf16.msra.mxu0 %v751
        %821 = vmatprep.subr.bf16.mxu0 0
        %822 = vmatpush1.bf16.msra.mxu0 %v750
        %823 = vmatprep.subr.bf16.mxu0 0
        %824 = vmatpush1.bf16.msra.mxu0 %v749
        %825 = vmatprep.subr.bf16.mxu0 0
        %826 = vmatpush2.bf16.msra.mxu0 0
        %827 = vmatprep.subr.bf16.mxu0 0
        %828 = vmatpush2.bf16.msra.mxu0 0
        %829 = vmatprep.subr.bf16.mxu0 0
        %830 = vmatpush2.bf16.msra.mxu0 0
        %831 = vmatprep.subr.bf16.mxu0 0
        %832 = vmatpush2.bf16.msra.mxu0 0
        %833 = vmatprep.subr.bf16.mxu0 0
        %834 = vmatpush2.bf16.msra.mxu0 0
        %835 = vmatprep.subr.bf16.mxu0 0
        %836 = vmatpush2.bf16.msra.mxu0 0
        %837 = vmatprep.subr.bf16.mxu0 0
        %838 = vmatpush2.bf16.msra.mxu0 0
        %839 = vmatprep.subr.bf16.mxu0 0
        %840 = vmatpush2.bf16.msra.mxu0 0
        %841 = vmatprep.mubr.bf16.mxu0 0
        %842 = vmatmul.mubr.bf16.gmra.mxu0 %v808
        %v843 = vpop.f32.mrf.mxu0
        %v844 = vadd.f32 0.0, %v843
        %v845 = vpop.f32.mrf.mxu0
        %v846 = vpop.f32.mrf.mxu0
        %v847 = vadd.f32 0.0, %v846
        %v848 = vpop.f32.mrf.mxu0
        %849 = vdwg.mxu0
        %850 = vmatprep.subr.bf16.mxu0 0
        %851 = vmatpush1.bf16.msra.mxu0 %v732
        %852 = vmatprep.subr.bf16.mxu0 0
        %853 = vmatpush1.bf16.msra.mxu0 %v731
        %854 = vmatprep.subr.bf16.mxu0 0
        %855 = vmatpush1.bf16.msra.mxu0 %v730
        %856 = vmatprep.subr.bf16.mxu0 0
        %857 = vmatpush1.bf16.msra.mxu0 %v729
        %858 = vmatprep.subr.bf16.mxu0 0
        %859 = vmatpush1.bf16.msra.mxu0 %v728
        %860 = vmatprep.subr.bf16.mxu0 0
        %861 = vmatpush1.bf16.msra.mxu0 %v727
        %862 = vmatprep.subr.bf16.mxu0 0
        %863 = vmatpush1.bf16.msra.mxu0 %v726
        %864 = vmatprep.subr.bf16.mxu0 0
        %865 = vmatpush1.bf16.msra.mxu0 %v725
        %866 = vmatprep.subr.bf16.mxu0 0
        %867 = vmatpush2.bf16.msra.mxu0 0
        %868 = vmatprep.subr.bf16.mxu0 0
        %869 = vmatpush2.bf16.msra.mxu0 0
        %870 = vmatprep.subr.bf16.mxu0 0
        %871 = vmatpush2.bf16.msra.mxu0 0
        %872 = vmatprep.subr.bf16.mxu0 0
        %873 = vmatpush2.bf16.msra.mxu0 0
        %874 = vmatprep.subr.bf16.mxu0 0
        %875 = vmatpush2.bf16.msra.mxu0 0
        %876 = vmatprep.subr.bf16.mxu0 0
        %877 = vmatpush2.bf16.msra.mxu0 0
        %878 = vmatprep.subr.bf16.mxu0 0
        %879 = vmatpush2.bf16.msra.mxu0 0
        %880 = vmatprep.subr.bf16.mxu0 0
        %881 = vmatpush2.bf16.msra.mxu0 0
        %882 = vmatprep.mubr.bf16.mxu0 0
        %883 = vmatmul.mubr.bf16.gmra.mxu0 %v808
        %v884 = vpop.f32.mrf.mxu0
        %v885 = vadd.f32 0.0, %v884
        %v886 = vpop.f32.mrf.mxu0
        %v887 = vpop.f32.mrf.mxu0
        %v888 = vadd.f32 0.0, %v887
        %v889 = vpop.f32.mrf.mxu0
        %890 = vdwg.mxu0
        %v891 = vrcp.pop %v885
        %v892 = vrcp.pop %v888
        %v893 = vmul.f32 %v844, %v891
        %v894 = vmul.f32 %v847, %v892
        %v895 = vpack.c.bf16 %v894, %v893
        %v896 = vld [vmem:[#allocation7] sm:$0xf]
        %v897 = vld [vmem:[#allocation7 + $0x4] sm:$0xf]
        %v898 = vld [vmem:[#allocation7 + $0x8] sm:$0xf]
        %v899 = vld [vmem:[#allocation7 + $0xc] sm:$0xf]
        %v900 = vld [vmem:[#allocation7 + $0x10] sm:$0xf]
        %v901 = vld [vmem:[#allocation7 + $0x14] sm:$0xf]
        %v902 = vld [vmem:[#allocation7 + $0x18] sm:$0xf]
        %v903 = vld [vmem:[#allocation7 + $0x1c] sm:$0xf]
        %v904 = vld [vmem:[#allocation7 + $0x20] sm:$0xf]
        %v905 = vld [vmem:[#allocation7 + $0x24] sm:$0xf]
        %v906 = vld [vmem:[#allocation7 + $0x28] sm:$0xf]
        %v907 = vld [vmem:[#allocation7 + $0x2c] sm:$0xf]
        %v908 = vld [vmem:[#allocation7 + $0x30] sm:$0xf]
        %v909 = vld [vmem:[#allocation7 + $0x34] sm:$0xf]
        %v910 = vld [vmem:[#allocation7 + $0x38] sm:$0xf]
        %v911 = vld [vmem:[#allocation7 + $0x3c] sm:$0xf]
        %v912 = vld [vmem:[%s6] sm:$0x1]
        %v914 = vlaneseq
        %v915 = vshrl.u32 %v914, 7
        %v916 = vsub.s32 0, %v915
        %v917 = vrot.slane %v912, %v916
        %v935 = vunpack.c.l.b16 %v896
        %v936 = vunpack.c.l.b16 %v897
        %v937 = vunpack.c.l.b16 %v898
        %v938 = vunpack.c.l.b16 %v899
        %v939 = vunpack.c.l.b16 %v900
        %v940 = vunpack.c.l.b16 %v901
        %v941 = vunpack.c.l.b16 %v902
        %v942 = vunpack.c.l.b16 %v903
        %v943 = vunpack.c.l.b16 %v904
        %v944 = vunpack.c.l.b16 %v905
        %v945 = vunpack.c.l.b16 %v906
        %v946 = vunpack.c.l.b16 %v907
        %v947 = vunpack.c.l.b16 %v908
        %v948 = vunpack.c.l.b16 %v909
        %v949 = vunpack.c.l.b16 %v910
        %v950 = vunpack.c.l.b16 %v911
        %v951 = vpack.c.b16 %v936, %v935
        %v952 = vpack.c.b16 %v938, %v937
        %v953 = vpack.c.b16 %v940, %v939
        %v954 = vpack.c.b16 %v942, %v941
        %v955 = vpack.c.b16 %v944, %v943
        %v956 = vpack.c.b16 %v946, %v945
        %v957 = vpack.c.b16 %v948, %v947
        %v958 = vpack.c.b16 %v950, %v949
        %967 = vmatprep.subr.bf16.mxu0 0
        %968 = vmatpush1.bf16.msra.mxu0 %v958
        %969 = vmatprep.subr.bf16.mxu0 0
        %970 = vmatpush1.bf16.msra.mxu0 %v957
        %971 = vmatprep.subr.bf16.mxu0 0
        %972 = vmatpush1.bf16.msra.mxu0 %v956
        %973 = vmatprep.subr.bf16.mxu0 0
        %974 = vmatpush1.bf16.msra.mxu0 %v955
        %975 = vmatprep.subr.bf16.mxu0 0
        %976 = vmatpush1.bf16.msra.mxu0 %v954
        %977 = vmatprep.subr.bf16.mxu0 0
        %978 = vmatpush1.bf16.msra.mxu0 %v953
        %979 = vmatprep.subr.bf16.mxu0 0
        %980 = vmatpush1.bf16.msra.mxu0 %v952
        %981 = vmatprep.subr.bf16.mxu0 0
        %982 = vmatpush1.bf16.msra.mxu0 %v951
        %983 = vmatprep.subr.bf16.mxu0 0
        %984 = vmatpush2.bf16.msra.mxu0 0
        %985 = vmatprep.subr.bf16.mxu0 0
        %986 = vmatpush2.bf16.msra.mxu0 0
        %987 = vmatprep.subr.bf16.mxu0 0
        %988 = vmatpush2.bf16.msra.mxu0 0
        %989 = vmatprep.subr.bf16.mxu0 0
        %990 = vmatpush2.bf16.msra.mxu0 0
        %991 = vmatprep.subr.bf16.mxu0 0
        %992 = vmatpush2.bf16.msra.mxu0 0
        %993 = vmatprep.subr.bf16.mxu0 0
        %994 = vmatpush2.bf16.msra.mxu0 0
        %995 = vmatprep.subr.bf16.mxu0 0
        %996 = vmatpush2.bf16.msra.mxu0 0
        %997 = vmatprep.subr.bf16.mxu0 0
        %998 = vmatpush2.bf16.msra.mxu0 0
        %999 = vmatprep.mubr.bf16.mxu0 0
        %1000 = vmatmul.mubr.bf16.gmra.mxu0 %v895
        %v1001 = vpop.f32.mrf.mxu0
        %v1002 = vadd.f32 %v917, %v1001
        %v1003 = vpop.f32.mrf.mxu0
        %v1004 = vpop.f32.mrf.mxu0
        %v1005 = vadd.f32 %v917, %v1004
        %v1006 = vpop.f32.mrf.mxu0
        %1007 = vdwg.mxu0
        %1008 = vst [vmem:[%s367] sm:$0xff] %v1002
        %1009 = vst [vmem:[%s367 + $0x8] sm:$0xff] %v1005
        %s1010 = sand.u32 %s208, 1
        %s1011 = scalar_lea.sflag [#allocation4], %s1010
        %s1012 = sand.u32 %s208, 1
        %s1013 = smul.addr %s1012, 16
        %s1014 = scalar_lea.vmem [#allocation10], %s1013
        // Predicated region
        $region69: #{tpu_custom_call.1} parent=51 // pred_check
          %p1015 = pneg %p218
        $region70: #{tpu_custom_call.1} parent=51 // pred_check_branch
          %1017 = sbr.rel (%p1015) target = $region72
        $region71: #{tpu_custom_call.1} parent=51 // pred_region
          %s1019 = ssub.s32 256, 256
          %1020 = vsyncadd %s1011, %s1019
          %s1021 = smul.addr %s27, 2
          %s1022 = smul.addr %s1021, 128
          %s1023 = scalar_lea.hbm %s8, %s1022
          %s1024 = sshll.u32 %s1014, 4
          %s1025 = int_to_ptr.vmem [resolvable:$true] %s1024
          %1030 = dma.vmem_to_hbm [thread:$0]  %s1025, 256, %s1023, %s1011, 128, 128, 8
        $region72: #{tpu_custom_call.1} parent=51 // pred_fallthru
          _
      $region52: #{tpu_custom_call.1} parent=5 // pred_fallthru
        _
      %p1031 = scmp.le.s32.totalorder 2, %s22
      // Predicated region
      $region73: #{tpu_custom_call.1} parent=5 // pred_check
        %p1032 = pneg %p1031
      $region74: #{tpu_custom_call.1} parent=5 // pred_check_branch
        %1034 = sbr.rel (%p1032) target = $region76
      $region75: #{tpu_custom_call.1} parent=5 // pred_region
        %s1035 = ssub.s32 %s22, 2
        // Predicated region
        $region77: #{tpu_custom_call.1} parent=75 // pred_check
          %p1036 = pneg %p224
        $region78: #{tpu_custom_call.1} parent=75 // pred_check_branch
          %1038 = sbr.rel (%p1036) target = $region80
        $region79: #{tpu_custom_call.1} parent=75 // pred_region
          %s1039 = sand.u32 %s209, 1
          %s1040 = scalar_lea.sflag [#allocation4], %s1039
          %s1041 = sand.u32 %s209, 1
          %s1042 = smul.addr %s1041, 16
          %s1043 = scalar_lea.vmem [#allocation10], %s1042
          %1044 = dma.done %s1040, 256
        $region80: #{tpu_custom_call.1} parent=75 // pred_fallthru
          _
      $region76: #{tpu_custom_call.1} parent=5 // pred_fallthru
        _
    $region6: #{tpu_custom_call.1} parent=1 // loop_footer
      %s26 = sadd.s32 1, %s22
    $region7: #{tpu_custom_call.1} parent=1 // loop_footer_branch
      %21 = sbr.rel target = $region3
    $region8: #{tpu_custom_call.1} parent=1 // loop_exit
      _
    %1045 = vsyncpa [#allocation3], 1
    %s1046 = scalar_lea.sflag [#allocation3], 1
    %1047 = vsyncpa %s1046, 1
    %1048 = vsyncpa [#allocation6], 1
    %1049 = vsyncpa [#allocation9], 1
    %1050 = vsyncpa [#allocation4], 1
    %s1051 = scalar_lea.sflag [#allocation4], 1
    %1052 = vsyncpa %s1051, 1

</llo_original>
